<compile_context>
chip_gen: v7x
topology: tpu7x:2x2x1
jax: 0.10.0
libtpu: 0.0.40
codegen_flags: <defaults>
</compile_context>

<pallas_src>
import jax
import jax.numpy as jnp
from jax.experimental import pallas as pl
from jax.experimental.pallas import tpu as pltpu

# ----------------------------- tiling policy ----------------------------------
TARGET_BLOCK_BYTES = 4 * 1024 * 1024   # per-ref per-buffer DMA granule (dtype-aware)
MIN_GRID_STEPS = 8                     # keep the pipeline multi-step when possible
MAX_COLS = 2048                        # lane-dense last dim (multiple of 128)
RAGGED_COLS = 512                      # slab width for the (rare) padded fallback


def _round_up(x, m):
    return -(-x // m) * m


def _choose_cols(n):
    """Largest multiple-of-128 divisor of n (<= MAX_COLS), preferring rows >= 8.
    Returns None when n is not a multiple of 128 (genuinely ragged size)."""
    if n % 128 != 0:
        return None
    best_any, best_tall = None, None
    for cols in range(128, MAX_COLS + 1, 128):
        if n % cols == 0:
            best_any = cols
            if n // cols >= 8:
                best_tall = cols
    return best_tall if best_tall is not None else best_any


def _fold(x):
    """View x as a lane-dense 2-D slab.  For sizes divisible by 128 this is a pure
    reshape (no HBM pad/slice copies); only genuinely ragged sizes pad the tail."""
    n = x.size
    cols = _choose_cols(n)
    if cols is not None:
        return x.reshape(n // cols, cols), n, False
    cols = RAGGED_COLS
    rows = -(-n // cols)
    flat = jnp.pad(x.reshape(-1), (0, rows * cols - n))
    return flat.reshape(rows, cols), n, True


def _unfold(y, shape, n, padded):
    if padded:
        return y.reshape(-1)[:n].reshape(shape)
    return y.reshape(shape)


def _plan_block_rows(rows, cols, itemsize):
    """Rows per block: sized by bytes (dtype-aware) and capped so the grid has at
    least MIN_GRID_STEPS steps whenever the tensor is big enough to benefit."""
    if rows <= 8:
        return rows                                      # full-dim block (legal)
    by_bytes = max(8, (TARGET_BLOCK_BYTES // (cols * itemsize)) // 8 * 8)
    by_steps = max(8, _round_up(-(-rows // MIN_GRID_STEPS), 8))
    return int(min(by_bytes, by_steps))


def _compiler_params(num_vmem_refs, block_rows, cols, itemsize):
    working = num_vmem_refs * 2 * block_rows * cols * itemsize   # double-buffered
    vmem_limit = int(max(32 << 20, working + (8 << 20)))         # <= ~40 MiB here
    return pltpu.CompilerParams(
        dimension_semantics=("parallel",),
        vmem_limit_bytes=vmem_limit,
    )


# ----------------------------- Pallas kernels ---------------------------------
def _scale2_kernel(s_ref, x1_ref, x2_ref, o1_ref, o2_ref):
    # s_ref: SMEM (2,) f32 scalars; x*/o*: VMEM (block_rows, cols) tiles.
    o1_ref[...] = (x1_ref[...] * s_ref[0]).astype(o1_ref.dtype)
    o2_ref[...] = (x2_ref[...] * s_ref[1]).astype(o2_ref.dtype)


def _scale1_kernel(s_ref, x_ref, o_ref):
    o_ref[...] = (x_ref[...] * s_ref[0]).astype(o_ref.dtype)


# ----------------------------- wrappers ----------------------------------------
def scale_apply(x, scale):
    """out = x * scale  (single-tensor fallback path)."""
    xs, n, padded = _fold(x)
    rows, cols = xs.shape
    itemsize = xs.dtype.itemsize
    block_rows = _plan_block_rows(rows, cols, itemsize)
    grid = (-(-rows // block_rows),)
    spec = pl.BlockSpec((block_rows, cols), lambda i: (i, 0))
    out = pl.pallas_call(
        _scale1_kernel,
        out_shape=jax.ShapeDtypeStruct(xs.shape, x.dtype),
        grid=grid,
        in_specs=[pl.BlockSpec(memory_space=pltpu.SMEM), spec],
        out_specs=spec,
        compiler_params=_compiler_params(2, block_rows, cols, itemsize),
    )(scale.astype(jnp.float32).reshape(-1), xs)
    return _unfold(out, x.shape, n, padded)


def scale_pair_apply(x1, x2, scales):
    """(x1 * scales[0], x2 * scales[1]) in one fused, tiled, pipelined pallas_call."""
    if x1.shape != x2.shape or x1.dtype != x2.dtype:
        return scale_apply(x1, scales[0:1]), scale_apply(x2, scales[1:2])
    x1s, n, padded = _fold(x1)
    x2s, _, _ = _fold(x2)
    rows, cols = x1s.shape
    itemsize = x1s.dtype.itemsize
    block_rows = _plan_block_rows(rows, cols, itemsize)
    grid = (-(-rows // block_rows),)
    spec = pl.BlockSpec((block_rows, cols), lambda i: (i, 0))
    o1s, o2s = pl.pallas_call(
        _scale2_kernel,
        out_shape=(jax.ShapeDtypeStruct(x1s.shape, x1.dtype),
                   jax.ShapeDtypeStruct(x2s.shape, x2.dtype)),
        grid=grid,
        in_specs=[pl.BlockSpec(memory_space=pltpu.SMEM), spec, spec],
        out_specs=(spec, spec),
        compiler_params=_compiler_params(4, block_rows, cols, itemsize),
    )(scales.astype(jnp.float32).reshape(-1), x1s, x2s)
    return _unfold(o1s, x1.shape, n, padded), _unfold(o2s, x2.shape, n, padded)


# ----------------------------- MFEM (JAX) --------------------------------------
class MFEMPallas:
    def __init__(self, channel_base_DE, channel_int):
        # Scale(1) for both weights (nn.Parameter([1.0]) in the reference).
        self.weight1 = jnp.array([1.0], dtype=jnp.float32)
        self.weight2 = jnp.array([1.0], dtype=jnp.float32)
        self._refresh_scales()
        # TODO(synk): Trans / FFEM / SFEM definitions are not provided in the
        # reference source (constructor even references an undefined `channel_in`);
        # they stay identity pass-throughs below.

    def _refresh_scales(self):
        # Hoisted once: the (2,) SMEM scalar vector fed to the fused kernel.
        self._scales = jnp.concatenate(
            [self.weight1.reshape(-1), self.weight2.reshape(-1)]).astype(jnp.float32)

    def _ffem(self, x_freq):
        # TODO(synk): FFEM source not provided — identity placeholder.
        return x_freq

    def _sfem(self, x_spat):
        # TODO(synk): SFEM source not provided — identity placeholder.
        return x_spat

    def _trans(self, a, b):
        # TODO(synk): Trans source not provided — passes its two inputs through.
        return a, b

    def __call__(self, x_freq, x_spat):
        out1, out2 = self._trans(self._ffem(x_freq), self._sfem(x_spat))
        # TODO(synk): once Trans/FFEM/SFEM are real kernels, fuse this scalar
        # multiply into their epilogue (or alias in/out) to drop the extra HBM trip.
        return scale_pair_apply(out1, out2, self._scales)


# ----------------------------- Demo / check ------------------------------------
if __name__ == "__main__":
    key = jax.random.PRNGKey(0)
    k1, k2, k3, k4 = jax.random.split(key, 4)

    mfem = MFEMPallas(channel_base_DE=4, channel_int=4)
    # Use non-trivial learnable values so the numerical check is meaningful.
    mfem.weight1 = jnp.array([0.731], dtype=jnp.float32)
    mfem.weight2 = jnp.array([-1.25], dtype=jnp.float32)
    mfem._refresh_scales()

    # Primary NCHW activation shape (natural-fold path, no pad/slice copies).
    B, C, H, W = 2, 4, 16, 16
    x_freq = jax.random.normal(k1, (B, C, H, W), dtype=jnp.float32)
    x_spat = jax.random.normal(k2, (B, C, H, W), dtype=jnp.float32)
    out1, out2 = mfem(x_freq, x_spat)
    out1 = jax.block_until_ready(out1)
    out2 = jax.block_until_ready(out2)
    assert out1.shape == (B, C, H, W) and out2.shape == (B, C, H, W)
    assert jnp.allclose(out1, x_freq * mfem.weight1[0], atol=1e-6)
    assert jnp.allclose(out2, x_spat * mfem.weight2[0], atol=1e-6)

    # Secondary shape: exercises a multi-step grid with a masked boundary block
    # while still using the copy-free natural fold.
    y1 = jax.random.normal(k3, (2, 4, 24, 24), dtype=jnp.float32)
    y2 = jax.random.normal(k4, (2, 4, 24, 24), dtype=jnp.float32)
    o1, o2 = mfem(y1, y2)
    o1 = jax.block_until_ready(o1)
    o2 = jax.block_until_ready(o2)
    assert jnp.allclose(o1, y1 * mfem.weight1[0], atol=1e-6)
    assert jnp.allclose(o2, y2 * mfem.weight2[0], atol=1e-6)

    print("KERNEL_OK")
</pallas_src>

<mosaic_0001>
module attributes {stable_mosaic.version = 11 : i64} {
  func.func @_scale2_kernel(%arg0: i32, %arg1: memref<2xf32, #tpu.memory_space<smem>>, %arg2: memref<8x256xf32, #tpu.memory_space<vmem>>, %arg3: memref<8x256xf32, #tpu.memory_space<vmem>>, %arg4: memref<8x256xf32, #tpu.memory_space<vmem>>, %arg5: memref<8x256xf32, #tpu.memory_space<vmem>>) attributes {dimension_semantics = [#tpu.dimension_semantics<parallel>], iteration_bounds = array<i64: 1>, scalar_prefetch = 0 : i64, scratch_operands = 0 : i64, tpu.core_type = #tpu.core_type<tc>, window_params = [{transform_indices = @transform_0, window_bounds = array<i64: 2>}, {transform_indices = @transform_1, window_bounds = array<i64: 8, 256>}, {transform_indices = @transform_2, window_bounds = array<i64: 8, 256>}, {transform_indices = @transform_3, window_bounds = array<i64: 8, 256>}, {transform_indices = @transform_4, window_bounds = array<i64: 8, 256>}]} {
    %c0 = arith.constant 0 : index
    %c0_0 = arith.constant 0 : index
    %0 = vector.load %arg2[%c0, %c0_0] : memref<8x256xf32, #tpu.memory_space<vmem>>, vector<8x256xf32>
    %c0_1 = arith.constant 0 : index
    %1 = memref.load %arg1[%c0_1] : memref<2xf32, #tpu.memory_space<smem>>
    %2 = vector.broadcast %1 : f32 to vector<8x256xf32>
    %3 = arith.mulf %0, %2 : vector<8x256xf32>
    %c0_2 = arith.constant 0 : index
    %c0_3 = arith.constant 0 : index
    %4 = vector.load %arg4[%c0_2, %c0_3] : memref<8x256xf32, #tpu.memory_space<vmem>>, vector<8x256xf32>
    tpu.vector_store %arg4[%c0_2, %c0_3], %3 {strides = array<i32>} : memref<8x256xf32, #tpu.memory_space<vmem>>, vector<8x256xf32>,
    %c0_4 = arith.constant 0 : index
    %c0_5 = arith.constant 0 : index
    %5 = vector.load %arg3[%c0_4, %c0_5] : memref<8x256xf32, #tpu.memory_space<vmem>>, vector<8x256xf32>
    %c1 = arith.constant 1 : index
    %6 = memref.load %arg1[%c1] : memref<2xf32, #tpu.memory_space<smem>>
    %7 = vector.broadcast %6 : f32 to vector<8x256xf32>
    %8 = arith.mulf %5, %7 : vector<8x256xf32>
    %c0_6 = arith.constant 0 : index
    %c0_7 = arith.constant 0 : index
    %9 = vector.load %arg5[%c0_6, %c0_7] : memref<8x256xf32, #tpu.memory_space<vmem>>, vector<8x256xf32>
    tpu.vector_store %arg5[%c0_6, %c0_7], %8 {strides = array<i32>} : memref<8x256xf32, #tpu.memory_space<vmem>>, vector<8x256xf32>,
    return
  }
  func.func @transform_0(%arg0: i32) -> i32 {
    %c0_i32 = arith.constant 0 : i32
    %c0_i32_0 = arith.constant 0 : i32
    return %c0_i32 : i32
  }
  func.func @transform_1(%arg0: i32) -> (i32, i32) {
    %c0_i32 = arith.constant 0 : i32
    %c0_i32_0 = arith.constant 0 : i32
    return %arg0, %c0_i32 : i32, i32
  }
  func.func @transform_2(%arg0: i32) -> (i32, i32) {
    %c0_i32 = arith.constant 0 : i32
    %c0_i32_0 = arith.constant 0 : i32
    return %arg0, %c0_i32 : i32, i32
  }
  func.func @transform_3(%arg0: i32) -> (i32, i32) {
    %c0_i32 = arith.constant 0 : i32
    %c0_i32_0 = arith.constant 0 : i32
    return %arg0, %c0_i32 : i32, i32
  }
  func.func @transform_4(%arg0: i32) -> (i32, i32) {
    %c0_i32 = arith.constant 0 : i32
    %c0_i32_0 = arith.constant 0 : i32
    return %arg0, %c0_i32 : i32, i32
  }
}

</mosaic_0001>

<llo_original>
// kernel: tpu_custom_call.1
$region0: #{tpu_custom_call.1}
  #allocation0 [shape = 'u32[]', space=smem, size = 0x4, offset = 0x4, fixed_abs, tag = 'smem constant byte address 0x4 - core index']
  #allocation1 [shape = 'u32[144,128]{1,0:T(1,128)}', space=vmem, size = 0x12000, scoped, tag = 'internal scratch']
  %s0 = inlined_call_operand.hbm [shape: f32[2], index: 0, kind: input, shape index: {}]
  %s1 = inlined_call_operand.hbm [shape: f32[8,256], index: 1, kind: input, shape index: {}]
  %s2 = inlined_call_operand.hbm [shape: f32[8,256], index: 2, kind: input, shape index: {}]
  %s3 = inlined_call_operand.hbm [shape: f32[8,256], index: 3, kind: output, shape index: {0}]
  %s4 = inlined_call_operand.hbm [shape: f32[8,256], index: 4, kind: output, shape index: {1}]
  %5 = xla_tuple %s3, %s4
  %s6 = sld [smem:[#allocation0]]
  $region42: #{tpu_custom_call.1} parent=0
    _
  %s8 = ssub.s32 1, %s6
  %s9 = scalar_select 0, %s8, %s6
  $region1: #{tpu_custom_call.1} parent=0
    #allocation2 [shape = 'u8[512]{0}', space=smem, size = 0x200, scoped, tag = 'input window, operand 0, single buffered']
    #allocation3 [shape = 's32[1]{0}', space=sflag, size = 0x4, scoped, tag = 'scoped memory for tpu_custom_call.1']
    #allocation4 [shape = 's32[1]{0}', space=sflag, size = 0x4, scoped, tag = 'scoped memory for tpu_custom_call.1']
    #allocation5 [shape = 's32[1]{0}', space=sflag, size = 0x4, scoped, tag = 'scoped memory for tpu_custom_call.1']
    #allocation6 [shape = 'u8[8192]{0}', space=vmem, size = 0x2000, scoped, tag = 'input window, operand 1, single buffered']
    #allocation7 [shape = 'u8[8192]{0}', space=vmem, size = 0x2000, scoped, tag = 'input window, operand 2, single buffered']
    #allocation8 [shape = 's32[1]{0}', space=sflag, size = 0x4, scoped, tag = 'scoped memory for tpu_custom_call.1']
    #allocation9 [shape = 'u8[8192]{0}', space=vmem, size = 0x2000, scoped, tag = 'output window, operand 0, single buffered']
    #allocation10 [shape = 'u8[8192]{0}', space=vmem, size = 0x2000, scoped, tag = 'output window, operand 1, single buffered']
    #allocation11 [shape = 's32[1]{0}', space=sflag, size = 0x4, scoped, tag = 'scoped memory for tpu_custom_call.1']
    %10 = vsyncpa [#allocation5], 0
    %11 = vsyncpa [#allocation3], 0
    %12 = vsyncpa [#allocation8], 0
    %13 = vsyncpa [#allocation4], 0
    %14 = vsyncpa [#allocation11], 0
    // Predicated region
    $region2: #{tpu_custom_call.1} parent=1 // pred_check
      _
    $region3: #{tpu_custom_call.1} parent=1 // pred_check_branch
      %16 = sbr.rel (0) target = $region5
    $region4: #{tpu_custom_call.1} parent=1 // pred_region
      %s18 = ssub.s32 16, 16
      %19 = vsyncadd [#allocation5], %s18
      %22 = dma.hbm_to_smem %s0, 16, [#allocation2], [#allocation5]
    $region5: #{tpu_custom_call.1} parent=1 // pred_fallthru
      _
    // Predicated region
    $region6: #{tpu_custom_call.1} parent=1 // pred_check
      _
    $region7: #{tpu_custom_call.1} parent=1 // pred_check_branch
      %24 = sbr.rel (0) target = $region9
    $region8: #{tpu_custom_call.1} parent=1 // pred_region
      %s26 = ssub.s32 256, 256
      %27 = vsyncadd [#allocation3], %s26
      %s29 = sshll.u32 [#allocation6], 4
      %s30 = int_to_ptr.vmem [resolvable:$true] %s29
      %32 = dma.hbm_to_vmem [thread:$0]  %s1, 256, %s30, [#allocation3]
    $region9: #{tpu_custom_call.1} parent=1 // pred_fallthru
      _
    // Predicated region
    $region10: #{tpu_custom_call.1} parent=1 // pred_check
      _
    $region11: #{tpu_custom_call.1} parent=1 // pred_check_branch
      %34 = sbr.rel (0) target = $region13
    $region12: #{tpu_custom_call.1} parent=1 // pred_region
      %s36 = ssub.s32 256, 256
      %37 = vsyncadd [#allocation8], %s36
      %s39 = sshll.u32 [#allocation7], 4
      %s40 = int_to_ptr.vmem [resolvable:$true] %s39
      %42 = dma.hbm_to_vmem [thread:$0]  %s2, 256, %s40, [#allocation8]
    $region13: #{tpu_custom_call.1} parent=1 // pred_fallthru
      _
    // Predicated region
    $region14: #{tpu_custom_call.1} parent=1 // pred_check
      _
    $region15: #{tpu_custom_call.1} parent=1 // pred_check_branch
      %44 = sbr.rel (0) target = $region17
    $region16: #{tpu_custom_call.1} parent=1 // pred_region
      %45 = dma.done [#allocation5], 16
    $region17: #{tpu_custom_call.1} parent=1 // pred_fallthru
      _
    // Predicated region
    $region18: #{tpu_custom_call.1} parent=1 // pred_check
      _
    $region19: #{tpu_custom_call.1} parent=1 // pred_check_branch
      %47 = sbr.rel (0) target = $region21
    $region20: #{tpu_custom_call.1} parent=1 // pred_region
      %48 = dma.done [#allocation3], 256
    $region21: #{tpu_custom_call.1} parent=1 // pred_fallthru
      _
    // Predicated region
    $region22: #{tpu_custom_call.1} parent=1 // pred_check
      _
    $region23: #{tpu_custom_call.1} parent=1 // pred_check_branch
      %50 = sbr.rel (0) target = $region25
    $region24: #{tpu_custom_call.1} parent=1 // pred_region
      %51 = dma.done [#allocation8], 256
    $region25: #{tpu_custom_call.1} parent=1 // pred_fallthru
      _
    %52 = sfence
    %v53 = vld [vmem:[#allocation6] sm:$0xff]
    %v54 = vld [vmem:[#allocation6 + $0x8] sm:$0xff]
    %s55 = sld [smem:[#allocation2]]
    %v56 = vstv %s55
    %v57 = vmul.f32 %v53, %v56
    %v58 = vmul.f32 %v54, %v56
    %59 = vst [vmem:[#allocation9] sm:$0xff] %v57
    %60 = vst [vmem:[#allocation9 + $0x8] sm:$0xff] %v58
    %v61 = vld [vmem:[#allocation7] sm:$0xff]
    %v62 = vld [vmem:[#allocation7 + $0x8] sm:$0xff]
    %s63 = sld [smem:[#allocation2 + $0x1]]
    %v64 = vstv %s63
    %v65 = vmul.f32 %v61, %v64
    %v66 = vmul.f32 %v62, %v64
    %67 = vst [vmem:[#allocation10] sm:$0xff] %v65
    %68 = vst [vmem:[#allocation10 + $0x8] sm:$0xff] %v66
    // Predicated region
    $region26: #{tpu_custom_call.1} parent=1 // pred_check
      _
    $region27: #{tpu_custom_call.1} parent=1 // pred_check_branch
      %70 = sbr.rel (0) target = $region29
    $region28: #{tpu_custom_call.1} parent=1 // pred_region
      %s72 = ssub.s32 256, 256
      %73 = vsyncadd [#allocation4], %s72
      %s75 = sshll.u32 [#allocation9], 4
      %s76 = int_to_ptr.vmem [resolvable:$true] %s75
      %78 = dma.vmem_to_hbm [thread:$0]  %s76, 256, %s3, [#allocation4]
    $region29: #{tpu_custom_call.1} parent=1 // pred_fallthru
      _
    // Predicated region
    $region30: #{tpu_custom_call.1} parent=1 // pred_check
      _
    $region31: #{tpu_custom_call.1} parent=1 // pred_check_branch
      %80 = sbr.rel (0) target = $region33
    $region32: #{tpu_custom_call.1} parent=1 // pred_region
      %s82 = ssub.s32 256, 256
      %83 = vsyncadd [#allocation11], %s82
      %s85 = sshll.u32 [#allocation10], 4
      %s86 = int_to_ptr.vmem [resolvable:$true] %s85
      %88 = dma.vmem_to_hbm [thread:$0]  %s86, 256, %s4, [#allocation11]
    $region33: #{tpu_custom_call.1} parent=1 // pred_fallthru
      _
    // Predicated region
    $region34: #{tpu_custom_call.1} parent=1 // pred_check
      _
    $region35: #{tpu_custom_call.1} parent=1 // pred_check_branch
      %90 = sbr.rel (0) target = $region37
    $region36: #{tpu_custom_call.1} parent=1 // pred_region
      %91 = dma.done [#allocation4], 256
    $region37: #{tpu_custom_call.1} parent=1 // pred_fallthru
      _
    // Predicated region
    $region38: #{tpu_custom_call.1} parent=1 // pred_check
      _
    $region39: #{tpu_custom_call.1} parent=1 // pred_check_branch
      %93 = sbr.rel (0) target = $region41
    $region40: #{tpu_custom_call.1} parent=1 // pred_region
      %94 = dma.done [#allocation11], 256
    $region41: #{tpu_custom_call.1} parent=1 // pred_fallthru
      _
    %95 = vsyncpa [#allocation3], 1
    %96 = vsyncpa [#allocation8], 1
    %97 = vsyncpa [#allocation4], 1
    %98 = vsyncpa [#allocation11], 1
    %99 = vsyncpa [#allocation5], 1

</llo_original>
